<compile_context>
chip_gen: v6e
topology: v6e:2x2x1
jax: 0.10.0
libtpu: 0.0.40
codegen_flags: <defaults>
</compile_context>

<pallas_src>
import functools

import jax
import jax.numpy as jnp
from jax import lax
from jax.experimental import pallas as pl
from jax.experimental.pallas import tpu as pltpu


_VMEM_LIMIT_BYTES = 48 * 1024 * 1024   # safe ceiling on v5e/v6e (128 MiB) and v7x (64 MiB)
_BLOCK_BUDGET_BYTES = 24 * 1024 * 1024  # working-set budget used when sizing blocks


# ----------------------------------------------------------------------------
# Kernel 1: hoisted input projection
#   gates_x = x_2d @ W_ih^T + (b_ih + b_hh),   x_2d: (T*B, I) -> (T*B, 4H)  [bf16 out]
# One big MXU matmul (bf16 operands, f32 accumulate) instead of T tiny matmuls.
# ----------------------------------------------------------------------------
def _input_proj_kernel(x_ref, w_ref, b_ref, out_ref):
    x = x_ref[...].astype(jnp.bfloat16)            # bf16 MXU operand (cast in-kernel)
    acc = jnp.dot(x, w_ref[...], preferred_element_type=jnp.float32)
    out_ref[...] = (acc + b_ref[...]).astype(out_ref.dtype)


def input_projection(x2d, wih_t_bf16, bias_row):
    rows, in_dim = x2d.shape
    n = wih_t_bf16.shape[1]
    # Fixed ~512-row slabs (measured sweet spot); cdiv grid handles the tail.
    tm = rows if rows <= 512 else 512
    grid_m = pl.cdiv(rows, tm)
    return pl.pallas_call(
        _input_proj_kernel,
        out_shape=jax.ShapeDtypeStruct((rows, n), jnp.bfloat16),
        grid_spec=pltpu.PrefetchScalarGridSpec(
            num_scalar_prefetch=0,
            grid=(grid_m,),
            in_specs=[
                pl.BlockSpec((tm, in_dim), lambda r: (r, 0)),   # x rows
                pl.BlockSpec((in_dim, n), lambda r: (0, 0)),    # W_ih^T (bf16, resident)
                pl.BlockSpec((1, n), lambda r: (0, 0)),         # combined bias (f32)
            ],
            out_specs=pl.BlockSpec((tm, n), lambda r: (r, 0)),
        ),
        compiler_params=pltpu.CompilerParams(
            dimension_semantics=("parallel",),
            vmem_limit_bytes=_VMEM_LIMIT_BYTES,
        ),
    )(x2d, wih_t_bf16, bias_row)


# ----------------------------------------------------------------------------
# Kernel 2: recurrent LSTM with fused weight dropout.
#   Grid = (batch_chunks ["parallel"], time_blocks ["arbitrary"]).
#   h/c persist in VMEM scratch across time blocks (re-initialized per batch
#   chunk at time_block 0); the dropped+scaled bf16 W_hh^T is copied once from
#   HBM into VMEM scratch at time_block 0 and reused for every step.
# ----------------------------------------------------------------------------
def _splitmix_bits(shape, seed_u32):
    """Counter-based uint32 hash (pure jnp, works on TPU and in interpret mode)."""
    r = lax.broadcasted_iota(jnp.int32, shape, 0).astype(jnp.uint32)
    c = lax.broadcasted_iota(jnp.int32, shape, 1).astype(jnp.uint32)
    z = r * jnp.uint32(shape[1]) + c
    z = z + seed_u32 * jnp.uint32(0x9E3779B9)
    z = z ^ (z >> 16)
    z = z * jnp.uint32(0x7FEB352D)
    z = z ^ (z >> 15)
    z = z * jnp.uint32(0x846CA68B)
    z = z ^ (z >> 16)
    return z


def _lstm_kernel(seed_ref, gx_ref, whh_hbm_ref, out_ref, w_scr, h_scr, c_scr, *,
                 hidden, tsteps, threshold, scale, apply_dropout):
    tb = pl.program_id(1)          # time-block index (serial, innermost)

    @pl.when(tb == 0)
    def _init():
        h_scr[...] = jnp.zeros_like(h_scr)
        c_scr[...] = jnp.zeros_like(c_scr)
        # One-shot HBM -> VMEM copy of the raw (bf16) W_hh^T; no pipelined buffers.
        pltpu.sync_copy(whh_hbm_ref, w_scr)
        if apply_dropout:
            w = w_scr[...].astype(jnp.float32)
            bits = _splitmix_bits(w.shape, seed_ref[0].astype(jnp.uint32))
            keep = bits >= jnp.uint32(threshold)        # P(keep) ~= 1 - p
            w = jnp.where(keep, w * jnp.float32(scale), jnp.float32(0.0))
            w_scr[...] = w.astype(w_scr.dtype)          # dropped+scaled, bf16

    H = hidden
    w = w_scr[...]                                      # bf16 (H, 4H)

    def step(i, carry):
        h, c = carry
        gx = gx_ref[i].astype(jnp.float32)              # (Bc, 4H), full-tile load
        gates = gx + jnp.dot(h.astype(jnp.bfloat16), w,
                             preferred_element_type=jnp.float32)
        i_g = jax.nn.sigmoid(gates[:, 0 * H:1 * H])
        f_g = jax.nn.sigmoid(gates[:, 1 * H:2 * H])
        g_g = jnp.tanh(gates[:, 2 * H:3 * H])
        o_g = jax.nn.sigmoid(gates[:, 3 * H:4 * H])
        c = f_g * c + i_g * g_g
        h = o_g * jnp.tanh(c)
        out_ref[i] = h.astype(out_ref.dtype)            # leading-axis store
        return (h, c)

    h, c = lax.fori_loop(0, tsteps, step, (h_scr[...], c_scr[...]), unroll=4)
    h_scr[...] = h
    c_scr[...] = c


def _pick_batch_split(B):
    """Split batch across two chunks only if each chunk stays sublane-aligned."""
    return 2 if (B % 16 == 0) else 1


def _pick_time_block(T, Bc, H, out_itemsize):
    """Largest divisor of T s.t. the per-grid-step slab is big but fits the budget."""
    per_step = Bc * (4 * H * 2 + H * out_itemsize) * 2   # gx(bf16)+out, double-buffered
    cap = max(1, min(T, _BLOCK_BUDGET_BYTES // max(per_step, 1),
                     max(32, 512 // max(Bc, 1))))
    for tc in range(int(cap), 0, -1):
        if T % tc == 0:
            return tc
    return 1


def weight_dropped_lstm_forward(x, wih_t_bf16, whh_t_bf16, bias_row, *,
                                weight_p, seed, training):
    """x: (T, B, I) f32.  wih_t_bf16: (I, 4H).  whh_t_bf16: (H, 4H).  bias_row: (1, 4H)."""
    T, B, I = x.shape
    H = whh_t_bf16.shape[0]
    assert whh_t_bf16.shape == (H, 4 * H) and wih_t_bf16.shape == (I, 4 * H)

    # Hoisted input projection (one large matmul; biases folded in), bf16 output.
    gx = input_projection(x.reshape(T * B, I), wih_t_bf16, bias_row)
    gx = gx.reshape(T, B, 4 * H)

    apply_dropout = bool(training) and float(weight_p) > 0.0
    threshold = min(int(float(weight_p) * (1 << 32)), (1 << 32) - 1)
    scale = 1.0 / (1.0 - float(weight_p)) if float(weight_p) < 1.0 else 0.0

    nbc = _pick_batch_split(B)         # v7x: 2nd TC takes half the batch when possible
    Bc = B // nbc
    tc = _pick_time_block(T, Bc, H, jnp.dtype(x.dtype).itemsize)

    kernel = functools.partial(
        _lstm_kernel, hidden=H, tsteps=tc,
        threshold=threshold, scale=scale, apply_dropout=apply_dropout)

    out = pl.pallas_call(
        kernel,
        out_shape=jax.ShapeDtypeStruct((T, B, H), x.dtype),
        grid_spec=pltpu.PrefetchScalarGridSpec(
            num_scalar_prefetch=1,                         # dropout seed -> SMEM
            grid=(nbc, T // tc),
            in_specs=[
                pl.BlockSpec((tc, Bc, 4 * H), lambda b, t, s: (t, b, 0)),  # gates_x slab
                pl.BlockSpec(memory_space=pl.ANY),                         # raw W_hh^T (HBM)
            ],
            out_specs=pl.BlockSpec((tc, Bc, H), lambda b, t, s: (t, b, 0)),
            scratch_shapes=[
                pltpu.VMEM((H, 4 * H), jnp.bfloat16),   # dropped W_hh^T (resident, bf16)
                pltpu.VMEM((Bc, H), jnp.float32),       # h state across time blocks
                pltpu.VMEM((Bc, H), jnp.float32),       # c state across time blocks
            ],
        ),
        compiler_params=pltpu.CompilerParams(
            # Batch chunks are independent ("parallel"); the time recurrence must
            # stay serial and innermost ("arbitrary") because h/c live in scratch.
            dimension_semantics=("parallel", "arbitrary"),
            vmem_limit_bytes=_VMEM_LIMIT_BYTES,
        ),
    )(jnp.asarray([seed], dtype=jnp.int32), gx, whh_t_bf16)
    return out


# ----------------------------------------------------------------------------
# WeightDropout wrapper (module = 1-layer LSTM, layer_names = ['weight_hh_l0']).
# Returns the LSTM output sequence (T, B, H), time-major like nn.LSTM default.
# ----------------------------------------------------------------------------
class WeightDropoutLSTM:
    def __init__(self, input_size, hidden_size, weight_p, key):
        self.input_size = input_size
        self.hidden_size = hidden_size
        self.weight_p = weight_p
        k1, k2, k3, k4 = jax.random.split(key, 4)
        s = 1.0 / jnp.sqrt(hidden_size)
        # PyTorch nn.LSTM parameter shapes, deterministic synthetic init (f32 masters).
        self.weight_ih_l0 = jax.random.uniform(
            k1, (4 * hidden_size, input_size), jnp.float32, -s, s)
        self.weight_hh_l0_raw = jax.random.uniform(
            k2, (4 * hidden_size, hidden_size), jnp.float32, -s, s)
        self.bias_ih_l0 = jax.random.uniform(k3, (4 * hidden_size,), jnp.float32, -s, s)
        self.bias_hh_l0 = jax.random.uniform(k4, (4 * hidden_size,), jnp.float32, -s, s)
        # Forward-ready layouts, computed ONCE (pre-transposed, pre-cast to bf16).
        self._wih_t = jnp.transpose(self.weight_ih_l0).astype(jnp.bfloat16)      # (I, 4H)
        self._whh_t_raw = jnp.transpose(self.weight_hh_l0_raw).astype(jnp.bfloat16)  # (H, 4H)
        self._bias = (self.bias_ih_l0 + self.bias_hh_l0).reshape(1, 4 * hidden_size)

    def __call__(self, x, *, training=True, dropout_seed=0):
        # _setweights(): weight_hh_l0 = F.dropout(weight_hh_l0_raw, p, training),
        # fused into the recurrent kernel. Then module.forward(x).
        return weight_dropped_lstm_forward(
            x, self._wih_t, self._whh_t_raw, self._bias,
            weight_p=self.weight_p, seed=dropout_seed, training=training)


# ----------------------------------------------------------------------------
# Pure-JAX reference LSTM (for eval-mode correctness check, f32 weights).
# ----------------------------------------------------------------------------
def _lstm_reference(x, w_ih, w_hh, b_ih, b_hh):
    T, B, _ = x.shape
    H = w_hh.shape[1]

    def step(carry, x_t):
        h, c = carry
        g = x_t @ w_ih.T + h @ w_hh.T + b_ih + b_hh
        i = jax.nn.sigmoid(g[:, 0 * H:1 * H])
        f = jax.nn.sigmoid(g[:, 1 * H:2 * H])
        gg = jnp.tanh(g[:, 2 * H:3 * H])
        o = jax.nn.sigmoid(g[:, 3 * H:4 * H])
        c = f * c + i * gg
        h = o * jnp.tanh(c)
        return (h, c), h

    init = (jnp.zeros((B, H), jnp.float32), jnp.zeros((B, H), jnp.float32))
    _, ys = jax.lax.scan(step, init, x)
    return ys


if __name__ == "__main__":
    key = jax.random.PRNGKey(0)
    k_param, k_x = jax.random.split(key)

    T, B, I, H = 8, 2, 32, 32
    model = WeightDropoutLSTM(input_size=I, hidden_size=H, weight_p=0.5, key=k_param)
    x = jax.random.normal(k_x, (T, B, I), dtype=jnp.float32)     # (T, B, I) time-major

    # Training-mode forward (weight dropout active).
    out_train = model(x, training=True, dropout_seed=123)
    jax.block_until_ready(out_train)

    # Eval-mode forward (dropout is identity, like F.dropout(training=False)).
    out_eval = model(x, training=False)
    jax.block_until_ready(out_eval)

    assert out_train.shape == (T, B, H) and out_eval.shape == (T, B, H)
    assert bool(jnp.all(jnp.isfinite(out_train))) and bool(jnp.all(jnp.isfinite(out_eval)))

    # Eval mode must match a plain-JAX f32 LSTM on the raw weight (bf16 matmul tolerance).
    ref = _lstm_reference(x, model.weight_ih_l0, model.weight_hh_l0_raw,
                          model.bias_ih_l0, model.bias_hh_l0)
    assert jnp.allclose(out_eval, ref, atol=3e-2, rtol=3e-2)

    # Training with p=0 is exactly the identity-dropout path.
    model_p0 = WeightDropoutLSTM(input_size=I, hidden_size=H, weight_p=0.0, key=k_param)
    out_p0 = model_p0(x, training=True, dropout_seed=7)
    ref_p0 = _lstm_reference(x, model_p0.weight_ih_l0, model_p0.weight_hh_l0_raw,
                             model_p0.bias_ih_l0, model_p0.bias_hh_l0)
    assert jnp.allclose(out_p0, ref_p0, atol=3e-2, rtol=3e-2)

    print("KERNEL_OK")
</pallas_src>

<mosaic_0001>
module attributes {stable_mosaic.version = 11 : i64} {
  func.func @_input_proj_kernel(%arg0: i32, %arg1: memref<16x32xf32, #tpu.memory_space<vmem>>, %arg2: memref<32x128xbf16, #tpu.memory_space<vmem>>, %arg3: memref<1x128xf32, #tpu.memory_space<vmem>>, %arg4: memref<16x128xbf16, #tpu.memory_space<vmem>>) attributes {dimension_semantics = [#tpu.dimension_semantics<parallel>], iteration_bounds = array<i64: 1>, scalar_prefetch = 0 : i64, scratch_operands = 0 : i64, tpu.core_type = #tpu.core_type<tc>, window_params = [{transform_indices = @transform_0, window_bounds = array<i64: 16, 32>}, {pipeline_mode = #tpu.pipeline_mode<synchronous>, transform_indices = @transform_1, window_bounds = array<i64: 32, 128>}, {pipeline_mode = #tpu.pipeline_mode<synchronous>, transform_indices = @transform_2, window_bounds = array<i64: 1, 128>}, {transform_indices = @transform_3, window_bounds = array<i64: 16, 128>}]} {
    %c0 = arith.constant 0 : index
    %c0_0 = arith.constant 0 : index
    %0 = vector.load %arg1[%c0, %c0_0] : memref<16x32xf32, #tpu.memory_space<vmem>>, vector<16x32xf32>
    %1 = arith.truncf %0 : vector<16x32xf32> to vector<16x32xbf16>
    %c0_1 = arith.constant 0 : index
    %c0_2 = arith.constant 0 : index
    %2 = vector.load %arg2[%c0_1, %c0_2] : memref<32x128xbf16, #tpu.memory_space<vmem>>, vector<32x128xbf16>
    %cst = arith.constant dense<0.000000e+00> : vector<16x128xf32>
    %3 = tpu.matmul %1, %2, %cst {dimension_numbers = #tpu.dot_dimension_numbers<[1], [0], [0], [1], [0, 0, 1, 1], [], []>} : vector<16x32xbf16>, vector<32x128xbf16>, vector<16x128xf32> -> vector<16x128xf32>
    %c0_3 = arith.constant 0 : index
    %c0_4 = arith.constant 0 : index
    %4 = vector.load %arg3[%c0_3, %c0_4] : memref<1x128xf32, #tpu.memory_space<vmem>>, vector<1x128xf32>
    %5 = vector.broadcast %4 : vector<1x128xf32> to vector<16x128xf32>
    %6 = arith.addf %3, %5 : vector<16x128xf32>
    %7 = arith.truncf %6 : vector<16x128xf32> to vector<16x128xbf16>
    %c0_5 = arith.constant 0 : index
    %c0_6 = arith.constant 0 : index
    %8 = vector.load %arg4[%c0_5, %c0_6] : memref<16x128xbf16, #tpu.memory_space<vmem>>, vector<16x128xbf16>
    tpu.vector_store %arg4[%c0_5, %c0_6], %7 {strides = array<i32>} : memref<16x128xbf16, #tpu.memory_space<vmem>>, vector<16x128xbf16>,
    return
  }
  func.func @transform_0(%arg0: i32) -> (i32, i32) {
    %c0_i32 = arith.constant 0 : i32
    %c0_i32_0 = arith.constant 0 : i32
    return %arg0, %c0_i32 : i32, i32
  }
  func.func @transform_1(%arg0: i32) -> (i32, i32) {
    %c0_i32 = arith.constant 0 : i32
    %c0_i32_0 = arith.constant 0 : i32
    %c0_i32_1 = arith.constant 0 : i32
    return %c0_i32, %c0_i32_0 : i32, i32
  }
  func.func @transform_2(%arg0: i32) -> (i32, i32) {
    %c0_i32 = arith.constant 0 : i32
    %c0_i32_0 = arith.constant 0 : i32
    %c0_i32_1 = arith.constant 0 : i32
    return %c0_i32, %c0_i32_0 : i32, i32
  }
  func.func @transform_3(%arg0: i32) -> (i32, i32) {
    %c0_i32 = arith.constant 0 : i32
    %c0_i32_0 = arith.constant 0 : i32
    return %arg0, %c0_i32 : i32, i32
  }
}

</mosaic_0001>

<llo_original>
// kernel: tpu_custom_call.1
$region0: #{tpu_custom_call.1}
  #allocation0 [shape = 'u32[]', space=smem, size = 0x4, offset = 0x4, fixed_abs, tag = 'smem constant byte address 0x4 - core index']
  #allocation1 [shape = 'u32[144,128]{1,0:T(1,128)}', space=vmem, size = 0x12000, scoped, tag = 'internal scratch']
  %s0 = inlined_call_operand.hbm [shape: f32[16,32], index: 0, kind: input, shape index: {}]
  %s1 = inlined_call_operand.hbm [shape: bf16[32,128], index: 1, kind: input, shape index: {}]
  %s2 = inlined_call_operand.vmem [shape: f32[1,128], index: 2, kind: input, shape index: {}]
  %s3 = inlined_call_operand.hbm [shape: bf16[16,128], index: 3, kind: output, shape index: {}]
  %s4 = sld [smem:[#allocation0]]
  $region30: #{tpu_custom_call.1} parent=0
    _
  %s6 = ssub.s32 1, %s4
  %s7 = scalar_select 0, %s6, %s4
  $region1: #{tpu_custom_call.1} parent=0
    #allocation2 [shape = 'u8[8192]{0}', space=vmem, size = 0x2000, scoped, tag = 'input window, operand 0, single buffered']
    #allocation3 [shape = 's32[1]{0}', space=sflag, size = 0x4, scoped, tag = 'scoped memory for tpu_custom_call.1']
    #allocation4 [shape = 's32[1]{0}', space=sflag, size = 0x4, scoped, tag = 'scoped memory for tpu_custom_call.1']
    #allocation5 [shape = 'u8[8192]{0}', space=vmem, size = 0x2000, scoped, tag = 'input window, operand 1, single buffered']
    #allocation6 [shape = 's32[1]{0}', space=sflag, size = 0x4, scoped, tag = 'scoped memory for tpu_custom_call.1']
    #allocation7 [shape = 'u8[4096]{0}', space=vmem, size = 0x1000, scoped, tag = 'output window, operand 0, single buffered']
    %8 = vsyncpa [#allocation3], 0
    %9 = vsyncpa [#allocation6], 0
    %10 = vsyncpa [#allocation4], 0
    // Predicated region
    $region2: #{tpu_custom_call.1} parent=1 // pred_check
      _
    $region3: #{tpu_custom_call.1} parent=1 // pred_check_branch
      %12 = sbr.rel (0) target = $region5
    $region4: #{tpu_custom_call.1} parent=1 // pred_region
      %s14 = ssub.s32 256, 256
      %15 = vsyncadd [#allocation3], %s14
      %s16 = sshll.u32 [#allocation2], 4
      %s17 = int_to_ptr.vmem [resolvable:$true] %s16
      %22 = dma.hbm_to_vmem [thread:$0]  %s0, 256, %s17, [#allocation3], 128, 128, 8
    $region5: #{tpu_custom_call.1} parent=1 // pred_fallthru
      _
    // Predicated region
    $region6: #{tpu_custom_call.1} parent=1 // pred_check
      _
    $region7: #{tpu_custom_call.1} parent=1 // pred_check_branch
      %24 = sbr.rel (0) target = $region9
    $region8: #{tpu_custom_call.1} parent=1 // pred_region
      %s26 = ssub.s32 256, 256
      %27 = vsyncadd [#allocation6], %s26
      %s28 = sshll.u32 [#allocation5], 4
      %s29 = int_to_ptr.vmem [resolvable:$true] %s28
      %34 = dma.hbm_to_vmem [thread:$0]  %s1, 256, %s29, [#allocation6], 64, 64, 4
    $region9: #{tpu_custom_call.1} parent=1 // pred_fallthru
      _
    // Predicated region
    $region10: #{tpu_custom_call.1} parent=1 // pred_check
      _
    $region11: #{tpu_custom_call.1} parent=1 // pred_check_branch
      %36 = sbr.rel (0) target = $region13
    $region12: #{tpu_custom_call.1} parent=1 // pred_region
      _
    $region13: #{tpu_custom_call.1} parent=1 // pred_fallthru
      _
    // Predicated region
    $region14: #{tpu_custom_call.1} parent=1 // pred_check
      _
    $region15: #{tpu_custom_call.1} parent=1 // pred_check_branch
      %38 = sbr.rel (0) target = $region17
    $region16: #{tpu_custom_call.1} parent=1 // pred_region
      %39 = dma.done [#allocation3], 256
    $region17: #{tpu_custom_call.1} parent=1 // pred_fallthru
      _
    // Predicated region
    $region18: #{tpu_custom_call.1} parent=1 // pred_check
      _
    $region19: #{tpu_custom_call.1} parent=1 // pred_check_branch
      %41 = sbr.rel (0) target = $region21
    $region20: #{tpu_custom_call.1} parent=1 // pred_region
      %42 = dma.done [#allocation6], 256
    $region21: #{tpu_custom_call.1} parent=1 // pred_fallthru
      _
    %v44 = vld [vmem:[#allocation2] sm:$0xff]
    %v45 = vld [vmem:[#allocation2 + $0x8] sm:$0xff]
    %v46 = vpack.c.bf16 %v45, %v44
    %v47 = vld [vmem:[#allocation5] sm:$0xf]
    %v48 = vld [vmem:[#allocation5 + $0x4] sm:$0xf]
    %v49 = vld [vmem:[#allocation5 + $0x8] sm:$0xf]
    %v50 = vld [vmem:[#allocation5 + $0xc] sm:$0xf]
    %v51 = vld [vmem:[%s2] sm:$0x1]
    %v53 = vlaneseq
    %v54 = vshrl.u32 %v53, 7
    %v55 = vsub.s32 0, %v54
    %v56 = vrot.slane %v51, %v55
    %v62 = vunpack.c.l.b16 %v47
    %v63 = vunpack.c.l.b16 %v48
    %v64 = vunpack.c.l.b16 %v49
    %v65 = vunpack.c.l.b16 %v50
    %v66 = vpack.c.b16 %v63, %v62
    %v67 = vpack.c.b16 %v65, %v64
    %vm70 = vcmask 261120
    %v72 = vsel %vm70, %v46, 0
    %74 = vmatprep.subr.bf16.mxu0 0
    %75 = vmatpush1.bf16.msra.mxu0 0
    %76 = vmatprep.subr.bf16.mxu0 0
    %77 = vmatpush1.bf16.msra.mxu0 0
    %78 = vmatprep.subr.bf16.mxu0 0
    %79 = vmatpush1.bf16.msra.mxu0 0
    %80 = vmatprep.subr.bf16.mxu0 0
    %81 = vmatpush1.bf16.msra.mxu0 0
    %82 = vmatprep.subr.bf16.mxu0 0
    %83 = vmatpush1.bf16.msra.mxu0 0
    %84 = vmatprep.subr.bf16.mxu0 0
    %85 = vmatpush1.bf16.msra.mxu0 0
    %86 = vmatprep.subr.bf16.mxu0 0
    %87 = vmatpush1.bf16.msra.mxu0 %v67
    %88 = vmatprep.subr.bf16.mxu0 0
    %89 = vmatpush1.bf16.msra.mxu0 %v66
    %90 = vmatprep.subr.bf16.mxu0 0
    %91 = vmatpush2.bf16.msra.mxu0 0
    %92 = vmatprep.subr.bf16.mxu0 0
    %93 = vmatpush2.bf16.msra.mxu0 0
    %94 = vmatprep.subr.bf16.mxu0 0
    %95 = vmatpush2.bf16.msra.mxu0 0
    %96 = vmatprep.subr.bf16.mxu0 0
    %97 = vmatpush2.bf16.msra.mxu0 0
    %98 = vmatprep.subr.bf16.mxu0 0
    %99 = vmatpush2.bf16.msra.mxu0 0
    %100 = vmatprep.subr.bf16.mxu0 0
    %101 = vmatpush2.bf16.msra.mxu0 0
    %102 = vmatprep.subr.bf16.mxu0 0
    %103 = vmatpush2.bf16.msra.mxu0 0
    %104 = vmatprep.subr.bf16.mxu0 0
    %105 = vmatpush2.bf16.msra.mxu0 0
    %106 = vmatprep.mubr.bf16.mxu0 0
    %107 = vmatmul.mubr.bf16.gmra.mxu0 %v72
    %v108 = vpop.f32.mrf.mxu0
    %v109 = vadd.f32 %v56, %v108
    %v110 = vpop.f32.mrf.mxu0
    %v111 = vpop.f32.mrf.mxu0
    %v112 = vadd.f32 %v56, %v111
    %v113 = vpop.f32.mrf.mxu0
    %114 = vdwg.mxu0
    %v115 = vpack.c.bf16 %v112, %v109
    %v117 = vunpack.c.l.b16 %v115
    %v118 = vunpack.c.h.b16 %v115
    %v119 = vpack.c.b16 %v117, %v117
    %v120 = vpack.c.b16 %v118, %v118
    %123 = vst [vmem:[#allocation7] sm:$0xf] %v119
    %124 = vst [vmem:[#allocation7 + $0x4] sm:$0xf] %v120
    // Predicated region
    $region22: #{tpu_custom_call.1} parent=1 // pred_check
      _
    $region23: #{tpu_custom_call.1} parent=1 // pred_check_branch
      %126 = sbr.rel (0) target = $region25
    $region24: #{tpu_custom_call.1} parent=1 // pred_region
      %s128 = ssub.s32 128, 128
      %129 = vsyncadd [#allocation4], %s128
      %s130 = sshll.u32 [#allocation7], 4
      %s131 = int_to_ptr.vmem [resolvable:$true] %s130
      %136 = dma.vmem_to_hbm [thread:$0]  %s131, 128, %s3, [#allocation4], 64, 64, 4
    $region25: #{tpu_custom_call.1} parent=1 // pred_fallthru
      _
    // Predicated region
    $region26: #{tpu_custom_call.1} parent=1 // pred_check
      _
    $region27: #{tpu_custom_call.1} parent=1 // pred_check_branch
      %138 = sbr.rel (0) target = $region29
    $region28: #{tpu_custom_call.1} parent=1 // pred_region
      %139 = dma.done [#allocation4], 128
    $region29: #{tpu_custom_call.1} parent=1 // pred_fallthru
      _
    %140 = vsyncpa [#allocation3], 1
    %141 = vsyncpa [#allocation6], 1
    %142 = vsyncpa [#allocation4], 1

</llo_original>
